<compile_context>
chip_gen: v7x
topology: tpu7x:2x2x1
jax: 0.10.0
libtpu: 0.0.40
codegen_flags: <defaults>
</compile_context>

<pallas_src>
import functools

import jax
import jax.numpy as jnp
import numpy as np
from jax.experimental import pallas as pl
from jax.experimental.pallas import tpu as pltpu

PAD_TOKEN_ID = 1   # RoBERTa/CodeT5 convention
EOS_TOKEN_ID = 2
NUM_CLASSES = 2
LANE = 128         # TPU lane width (last/fast axis)
SUBLANE = 8


def _round_up(x, m):
    return (x + m - 1) // m * m


# ---------------------------------------------------------------------------
# Pallas kernel: classification head + softmax + cross-entropy partial sums
# ---------------------------------------------------------------------------
def _classifier_kernel(x_ref, w1_ref, b1_ref, w2_ref, b2_ref, onehot_ref,
                       prob_ref, loss_part_ref):
    # dense: Linear(2H -> H), bf16 inputs, f32 MXU accumulation, tanh in f32
    h = jnp.tanh(
        jnp.dot(x_ref[...], w1_ref[...], preferred_element_type=jnp.float32)
        + b1_ref[...])                                            # (TM, Hp) f32
    # out_proj: Linear(H -> 2), lane-padded to 128 output columns
    logits = (jnp.dot(h.astype(w2_ref.dtype), w2_ref[...],
                      preferred_element_type=jnp.float32)
              + b2_ref[...])                                      # (TM, 128) f32
    # mask padded class columns so they never enter softmax / CE
    col = jax.lax.broadcasted_iota(jnp.int32, logits.shape, 1)
    logits = jnp.where(col < NUM_CLASSES, logits, jnp.float32(-1e30))
    # softmax over last dim (matches F.softmax(logits) on 2-D input)
    m = jnp.max(logits, axis=-1, keepdims=True)
    e = jnp.exp(logits - m)
    s = jnp.sum(e, axis=-1, keepdims=True)
    prob_ref[...] = e * pl.reciprocal(s, approx=True)             # lane-dense store
    # CrossEntropyLoss partial sum for this tile (padded rows/cols have 0 onehot)
    log_probs = (logits - m) - jnp.log(s)
    part = -jnp.sum(onehot_ref[...] * log_probs)
    loss_part_ref[...] = jnp.broadcast_to(part, loss_part_ref.shape)


def clone_classifier_head(x2h, w1, b1, w2, b2, labels, *, block_m=256):
    """x2h: (B, 2H) — concatenated eos vectors of each code pair.

    Returns (loss, prob) with prob of shape (B, 2).
    """
    B, K = x2h.shape
    H = w1.shape[1]
    Kp = _round_up(K, LANE)
    Hp = _round_up(H, LANE)
    Np = LANE
    tm = min(block_m, _round_up(B, SUBLANE))        # rows per grid step
    Bp = _round_up(B, tm)
    grid = Bp // tm

    # zero-pad to lane/sublane friendly shapes; bf16 in, f32 accumulate
    x_p = jnp.pad(x2h.astype(jnp.bfloat16), ((0, Bp - B), (0, Kp - K)))
    w1_p = jnp.pad(w1.astype(jnp.bfloat16), ((0, Kp - K), (0, Hp - H)))
    b1_p = jnp.pad(b1.astype(jnp.float32), ((0, 0), (0, Hp - H)))
    w2_p = jnp.pad(w2.astype(jnp.bfloat16), ((0, Hp - H), (0, Np - NUM_CLASSES)))
    b2_p = jnp.pad(b2.astype(jnp.float32), ((0, 0), (0, Np - NUM_CLASSES)))
    onehot = jax.nn.one_hot(labels, NUM_CLASSES, dtype=jnp.float32)
    onehot_p = jnp.pad(onehot, ((0, Bp - B), (0, Np - NUM_CLASSES)))

    prob_pad, loss_parts = pl.pallas_call(
        _classifier_kernel,
        out_shape=(jax.ShapeDtypeStruct((Bp, Np), jnp.float32),
                   jax.ShapeDtypeStruct((1, grid * LANE), jnp.float32)),
        grid=(grid,),
        in_specs=[
            pl.BlockSpec((tm, Kp), lambda i: (i, 0)),    # x tile (streamed)
            pl.BlockSpec((Kp, Hp), lambda i: (0, 0)),    # w1 (resident)
            pl.BlockSpec((1, Hp), lambda i: (0, 0)),     # b1
            pl.BlockSpec((Hp, Np), lambda i: (0, 0)),    # w2 (lane-padded)
            pl.BlockSpec((1, Np), lambda i: (0, 0)),     # b2
            pl.BlockSpec((tm, Np), lambda i: (i, 0)),    # one-hot labels tile
        ],
        out_specs=(pl.BlockSpec((tm, Np), lambda i: (i, 0)),       # prob slab
                   pl.BlockSpec((1, LANE), lambda i: (0, i))),     # loss partials
        compiler_params=pltpu.CompilerParams(
            dimension_semantics=("parallel",),
            vmem_limit_bytes=32 * 1024 * 1024),
    )(x_p, w1_p, b1_p, w2_p, b2_p, onehot_p)

    loss = jnp.sum(loss_parts.reshape(grid, LANE)[:, 0]) / B
    prob = prob_pad[:B, :NUM_CLASSES]
    return loss, prob


# ---------------------------------------------------------------------------
# Synthetic encoder stand-in
# ---------------------------------------------------------------------------
def synthetic_decoder_hidden_states(source_ids_flat, embed_table):
    # TODO(synk): the real CloneModel runs a full CodeT5/T5 encoder-decoder; the
    # last decoder hidden state is replaced by a deterministic embedding lookup
    # so the downstream (Pallas) classifier path is exercised exactly.
    return embed_table[source_ids_flat]          # (N, S, H)


def check_eos_counts(source_ids, block_size):
    """Debug-only mirror of the module's ValueError (forces a host sync)."""
    src = np.asarray(source_ids).reshape(-1, block_size)
    counts = (src == EOS_TOKEN_ID).sum(axis=1)
    if np.unique(counts).size > 1:
        raise ValueError('All examples must have the same number of <eos> tokens.')


# ---------------------------------------------------------------------------
# Full CloneModel.forward equivalent (jittable, no host syncs)
# ---------------------------------------------------------------------------
@functools.partial(jax.jit, static_argnames=("block_size", "block_m"))
def clone_model_forward(source_ids, labels, params, block_size, block_m=256):
    """source_ids: (B, 2, S) int32, labels: (B,) int32 -> (loss, prob)."""
    embed_table, w1, b1, w2, b2 = params
    hidden = embed_table.shape[-1]

    src = source_ids.reshape(-1, block_size)                         # (N, S)
    # attention_mask = src != PAD_TOKEN_ID (consumed only by the encoder stub)
    _ = (src != PAD_TOKEN_ID)

    hidden_states = synthetic_decoder_hidden_states(src, embed_table)  # (N,S,H)

    # vec = hidden_states[eos_mask].view(N, -1, H)[:, -1, :]  -> last eos token
    eos_mask = (src == EOS_TOKEN_ID)
    S = src.shape[1]
    last_eos_idx = (S - 1) - jnp.argmax(eos_mask[:, ::-1].astype(jnp.int32), axis=1)
    # TODO(synk): this (N,H) gather could be fused into the pallas_call via
    # PrefetchScalarGridSpec + pl.Element row indices to skip one HBM round trip.
    vec = hidden_states[jnp.arange(src.shape[0]), last_eos_idx]      # (N, H)

    # classifier reshapes (-1, 2H): pairs of sequences are concatenated
    x2h = vec.reshape(-1, 2 * hidden)                                # (B, 2H)
    return clone_classifier_head(x2h, w1, b1, w2, b2, labels, block_m=block_m)


# ---------------------------------------------------------------------------
# Reference (plain JAX, same bf16-in / f32-acc data path) for correctness check
# ---------------------------------------------------------------------------
def _reference_head(x2h, w1, b1, w2, b2, labels):
    h = jnp.tanh(jnp.dot(x2h.astype(jnp.bfloat16), w1.astype(jnp.bfloat16),
                         preferred_element_type=jnp.float32) + b1)
    logits = jnp.dot(h.astype(jnp.bfloat16), w2.astype(jnp.bfloat16),
                     preferred_element_type=jnp.float32) + b2
    prob = jax.nn.softmax(logits, axis=-1)
    logp = jax.nn.log_softmax(logits, axis=-1)
    loss = -jnp.mean(jnp.take_along_axis(logp, labels[:, None], axis=1))
    return loss, prob


if __name__ == "__main__":
    B_pairs = 16       # number of clone-candidate pairs
    S = 16             # args.block_size
    H = 32             # config.hidden_size
    VOCAB = 64
    BLOCK_M = 8        # small row tile so the test exercises a multi-step grid

    key = jax.random.PRNGKey(0)
    k_ids, k_emb, k_w1, k_b1, k_w2, k_b2, k_lab = jax.random.split(key, 7)

    # deterministic source ids: tokens in [4, VOCAB), eos at the last position
    source_ids = jax.random.randint(k_ids, (B_pairs, 2, S), 4, VOCAB, dtype=jnp.int32)
    source_ids = source_ids.at[:, :, -1].set(EOS_TOKEN_ID)
    labels = jax.random.randint(k_lab, (B_pairs,), 0, NUM_CLASSES, dtype=jnp.int32)

    # deterministic parameters (synthetic init; shapes from the module __init__)
    embed_table = 0.1 * jax.random.normal(k_emb, (VOCAB, H), dtype=jnp.float32)
    w1 = 0.05 * jax.random.normal(k_w1, (2 * H, H), dtype=jnp.float32)        # dense
    b1 = 0.05 * jax.random.normal(k_b1, (1, H), dtype=jnp.float32)
    w2 = 0.05 * jax.random.normal(k_w2, (H, NUM_CLASSES), dtype=jnp.float32)  # out_proj
    b2 = 0.05 * jax.random.normal(k_b2, (1, NUM_CLASSES), dtype=jnp.float32)
    params = (embed_table, w1, b1, w2, b2)

    # module's eos-count validation, kept off the jitted hot path
    check_eos_counts(source_ids, S)

    loss, prob = clone_model_forward(source_ids, labels, params,
                                     block_size=S, block_m=BLOCK_M)
    loss, prob = jax.block_until_ready((loss, prob))

    # cross-check the Pallas head against a plain-JAX reference
    src = source_ids.reshape(-1, S)
    hs = embed_table[src]
    eos_mask = (src == EOS_TOKEN_ID)
    last_eos = (S - 1) - jnp.argmax(eos_mask[:, ::-1].astype(jnp.int32), axis=1)
    vec = hs[jnp.arange(src.shape[0]), last_eos].reshape(-1, 2 * H)
    ref_loss, ref_prob = _reference_head(vec, w1, b1, w2, b2, labels)

    np.testing.assert_allclose(np.asarray(prob), np.asarray(ref_prob),
                               rtol=5e-3, atol=5e-3)
    np.testing.assert_allclose(float(loss), float(ref_loss), rtol=5e-3, atol=5e-3)

    print("KERNEL_OK")
</pallas_src>

<mosaic_0001>
module attributes {stable_mosaic.version = 11 : i64} {
  func.func @_classifier_kernel(%arg0: i32, %arg1: memref<8x128xbf16, #tpu.memory_space<vmem>>, %arg2: memref<128x128xbf16, #tpu.memory_space<vmem>>, %arg3: memref<1x128xf32, #tpu.memory_space<vmem>>, %arg4: memref<128x128xbf16, #tpu.memory_space<vmem>>, %arg5: memref<1x128xf32, #tpu.memory_space<vmem>>, %arg6: memref<8x128xf32, #tpu.memory_space<vmem>>, %arg7: memref<8x128xf32, #tpu.memory_space<vmem>>, %arg8: memref<1x128xf32, #tpu.memory_space<vmem>>) attributes {dimension_semantics = [#tpu.dimension_semantics<parallel>], iteration_bounds = array<i64: 2>, scalar_prefetch = 0 : i64, scratch_operands = 0 : i64, tpu.core_type = #tpu.core_type<tc>, window_params = [{transform_indices = @transform_0, window_bounds = array<i64: 8, 128>}, {pipeline_mode = #tpu.pipeline_mode<synchronous>, transform_indices = @transform_1, window_bounds = array<i64: 128, 128>}, {pipeline_mode = #tpu.pipeline_mode<synchronous>, transform_indices = @transform_2, window_bounds = array<i64: 1, 128>}, {pipeline_mode = #tpu.pipeline_mode<synchronous>, transform_indices = @transform_3, window_bounds = array<i64: 128, 128>}, {pipeline_mode = #tpu.pipeline_mode<synchronous>, transform_indices = @transform_4, window_bounds = array<i64: 1, 128>}, {transform_indices = @transform_5, window_bounds = array<i64: 8, 128>}, {transform_indices = @transform_6, window_bounds = array<i64: 8, 128>}, {transform_indices = @transform_7, window_bounds = array<i64: 1, 128>}]} {
    %c0 = arith.constant 0 : index
    %c0_0 = arith.constant 0 : index
    %0 = vector.load %arg1[%c0, %c0_0] : memref<8x128xbf16, #tpu.memory_space<vmem>>, vector<8x128xbf16>
    %c0_1 = arith.constant 0 : index
    %c0_2 = arith.constant 0 : index
    %1 = vector.load %arg2[%c0_1, %c0_2] : memref<128x128xbf16, #tpu.memory_space<vmem>>, vector<128x128xbf16>
    %cst = arith.constant dense<0.000000e+00> : vector<8x128xf32>
    %2 = tpu.matmul %0, %1, %cst {dimension_numbers = #tpu.dot_dimension_numbers<[1], [0], [0], [1], [0, 0, 1, 1], [], []>} : vector<8x128xbf16>, vector<128x128xbf16>, vector<8x128xf32> -> vector<8x128xf32>
    %c0_3 = arith.constant 0 : index
    %c0_4 = arith.constant 0 : index
    %3 = vector.load %arg3[%c0_3, %c0_4] : memref<1x128xf32, #tpu.memory_space<vmem>>, vector<1x128xf32>
    %4 = vector.broadcast %3 : vector<1x128xf32> to vector<8x128xf32>
    %5 = arith.addf %2, %4 : vector<8x128xf32>
    %6 = math.tanh %5 : vector<8x128xf32>
    %7 = arith.truncf %6 : vector<8x128xf32> to vector<8x128xbf16>
    %c0_5 = arith.constant 0 : index
    %c0_6 = arith.constant 0 : index
    %8 = vector.load %arg4[%c0_5, %c0_6] : memref<128x128xbf16, #tpu.memory_space<vmem>>, vector<128x128xbf16>
    %cst_7 = arith.constant dense<0.000000e+00> : vector<8x128xf32>
    %9 = tpu.matmul %7, %8, %cst_7 {dimension_numbers = #tpu.dot_dimension_numbers<[1], [0], [0], [1], [0, 0, 1, 1], [], []>} : vector<8x128xbf16>, vector<128x128xbf16>, vector<8x128xf32> -> vector<8x128xf32>
    %c0_8 = arith.constant 0 : index
    %c0_9 = arith.constant 0 : index
    %10 = vector.load %arg5[%c0_8, %c0_9] : memref<1x128xf32, #tpu.memory_space<vmem>>, vector<1x128xf32>
    %11 = vector.broadcast %10 : vector<1x128xf32> to vector<8x128xf32>
    %12 = arith.addf %9, %11 : vector<8x128xf32>
    %13 = tpu.iota {dimensions = array<i32: 1>} : vector<8x128xi32>
    %c2_i32 = arith.constant 2 : i32
    %14 = vector.broadcast %c2_i32 : i32 to vector<8x128xi32>
    %15 = arith.cmpi slt, %13, %14 : vector<8x128xi32>
    %cst_10 = arith.constant -1.000000e+30 : f32
    %16 = vector.broadcast %cst_10 : f32 to vector<8x128xf32>
    %17 = arith.select %15, %12, %16 : vector<8x128xi1>, vector<8x128xf32>
    %cst_11 = arith.constant dense<0xFF800000> : vector<8xf32>
    %18 = vector.multi_reduction <maximumf>, %17, %cst_11 [1] : vector<8x128xf32> to vector<8xf32>
    %19 = vector.shape_cast %18 : vector<8xf32> to vector<8x1xf32>
    %20 = vector.broadcast %19 : vector<8x1xf32> to vector<8x128xf32>
    %21 = arith.subf %17, %20 : vector<8x128xf32>
    %22 = math.exp %21 : vector<8x128xf32>
    %cst_12 = arith.constant dense<0.000000e+00> : vector<8xf32>
    %23 = vector.multi_reduction <add>, %22, %cst_12 [1] : vector<8x128xf32> to vector<8xf32>
    %24 = vector.shape_cast %23 : vector<8xf32> to vector<8x1xf32>
    %25 = tpu.reciprocal %24 {approx = true} : vector<8x1xf32> -> vector<8x1xf32>
    %26 = vector.broadcast %25 : vector<8x1xf32> to vector<8x128xf32>
    %27 = arith.mulf %22, %26 : vector<8x128xf32>
    %c0_13 = arith.constant 0 : index
    %c0_14 = arith.constant 0 : index
    %28 = vector.load %arg7[%c0_13, %c0_14] : memref<8x128xf32, #tpu.memory_space<vmem>>, vector<8x128xf32>
    tpu.vector_store %arg7[%c0_13, %c0_14], %27 {strides = array<i32>} : memref<8x128xf32, #tpu.memory_space<vmem>>, vector<8x128xf32>,
    %29 = vector.broadcast %19 : vector<8x1xf32> to vector<8x128xf32>
    %30 = arith.subf %17, %29 : vector<8x128xf32>
    %31 = math.log %24 : vector<8x1xf32>
    %32 = vector.broadcast %31 : vector<8x1xf32> to vector<8x128xf32>
    %33 = arith.subf %30, %32 : vector<8x128xf32>
    %c0_15 = arith.constant 0 : index
    %c0_16 = arith.constant 0 : index
    %34 = vector.load %arg6[%c0_15, %c0_16] : memref<8x128xf32, #tpu.memory_space<vmem>>, vector<8x128xf32>
    %35 = arith.mulf %34, %33 : vector<8x128xf32>
    %36 = vector.shape_cast %35 : vector<8x128xf32> to vector<1x8x128xf32>
    %cst_17 = arith.constant dense<0.000000e+00> : vector<1xf32>
    %37 = vector.multi_reduction <add>, %36, %cst_17 [1, 2] : vector<1x8x128xf32> to vector<1xf32>
    %38 = vector.shape_cast %37 : vector<1xf32> to vector<1x1x1xf32>
    %39 = vector.extract %38[0, 0, 0] : f32 from vector<1x1x1xf32>
    %cst_18 = arith.constant 0.000000e+00 : f32
    %40 = arith.subf %cst_18, %39 : f32
    %41 = vector.broadcast %40 : f32 to vector<1x128xf32>
    %c0_19 = arith.constant 0 : index
    %c0_20 = arith.constant 0 : index
    %42 = vector.load %arg8[%c0_19, %c0_20] : memref<1x128xf32, #tpu.memory_space<vmem>>, vector<1x128xf32>
    tpu.vector_store %arg8[%c0_19, %c0_20], %41 {strides = array<i32>} : memref<1x128xf32, #tpu.memory_space<vmem>>, vector<1x128xf32>,
    return
  }
  func.func @transform_0(%arg0: i32) -> (i32, i32) {
    %c0_i32 = arith.constant 0 : i32
    %c0_i32_0 = arith.constant 0 : i32
    return %arg0, %c0_i32 : i32, i32
  }
  func.func @transform_1(%arg0: i32) -> (i32, i32) {
    %c0_i32 = arith.constant 0 : i32
    %c0_i32_0 = arith.constant 0 : i32
    %c0_i32_1 = arith.constant 0 : i32
    return %c0_i32, %c0_i32_0 : i32, i32
  }
  func.func @transform_2(%arg0: i32) -> (i32, i32) {
    %c0_i32 = arith.constant 0 : i32
    %c0_i32_0 = arith.constant 0 : i32
    %c0_i32_1 = arith.constant 0 : i32
    return %c0_i32, %c0_i32_0 : i32, i32
  }
  func.func @transform_3(%arg0: i32) -> (i32, i32) {
    %c0_i32 = arith.constant 0 : i32
    %c0_i32_0 = arith.constant 0 : i32
    %c0_i32_1 = arith.constant 0 : i32
    return %c0_i32, %c0_i32_0 : i32, i32
  }
  func.func @transform_4(%arg0: i32) -> (i32, i32) {
    %c0_i32 = arith.constant 0 : i32
    %c0_i32_0 = arith.constant 0 : i32
    %c0_i32_1 = arith.constant 0 : i32
    return %c0_i32, %c0_i32_0 : i32, i32
  }
  func.func @transform_5(%arg0: i32) -> (i32, i32) {
    %c0_i32 = arith.constant 0 : i32
    %c0_i32_0 = arith.constant 0 : i32
    return %arg0, %c0_i32 : i32, i32
  }
  func.func @transform_6(%arg0: i32) -> (i32, i32) {
    %c0_i32 = arith.constant 0 : i32
    %c0_i32_0 = arith.constant 0 : i32
    return %arg0, %c0_i32 : i32, i32
  }
  func.func @transform_7(%arg0: i32) -> (i32, i32) {
    %c0_i32 = arith.constant 0 : i32
    %c0_i32_0 = arith.constant 0 : i32
    return %c0_i32, %arg0 : i32, i32
  }
}

</mosaic_0001>

<llo_original>
// kernel: clone_model_forward.1
$region0: #{clone_model_forward.1}
  #allocation0 [shape = 'u32[]', space=smem, size = 0x4, offset = 0x4, fixed_abs, tag = 'smem constant byte address 0x4 - core index']
  #allocation1 [shape = 'u32[144,128]{1,0:T(1,128)}', space=vmem, size = 0x12000, scoped, tag = 'internal scratch']
  %s0 = inlined_call_operand.vmem [shape: bf16[16,128], index: 0, kind: input, shape index: {}]
  %s1 = inlined_call_operand.vmem [shape: bf16[128,128], index: 1, kind: input, shape index: {}]
  %s2 = inlined_call_operand.vmem [shape: f32[1,128], index: 2, kind: input, shape index: {}]
  %s3 = inlined_call_operand.vmem [shape: bf16[128,128], index: 3, kind: input, shape index: {}]
  %s4 = inlined_call_operand.vmem [shape: f32[1,128], index: 4, kind: input, shape index: {}]
  %s5 = inlined_call_operand.vmem [shape: f32[16,128], index: 5, kind: input, shape index: {}]
  %s6 = inlined_call_operand.vmem [shape: f32[16,128], index: 6, kind: output, shape index: {0}]
  %s7 = inlined_call_operand.vmem [shape: f32[1,256], index: 7, kind: output, shape index: {1}]
  %8 = xla_tuple %s6, %s7
  %s9 = sld [smem:[#allocation0]]
  $region65: #{clone_model_forward.1} parent=0
    _
  %s11 = ssub.s32 1, %s9
  %s12 = scalar_select 0, %s11, %s9
  loop: start=0, step=1, limit=4
  $region2: #{clone_model_forward.1} parent=0 // loop_pre_header
    _
  $region3: #{clone_model_forward.1} parent=0 // loop_header
    %s14 = sphi 0, %s18
    %p15 = scmp.ge.s32.totalorder %s14, 4
    %s24 = sphi 0, %s26
    %s27 = sphi 0, %s24
    %s28 = sphi 0, %s27
    %s44 = sphi 0, %s28
    %s48 = sphi 0, %s48
    %s50 = sphi 0, %s48
    %s51 = sphi 0, %s50
    %s65 = sphi 0, %s51
    %s69 = sphi 0, %s69
    %s71 = sphi 0, %s69
    %s72 = sphi 0, %s71
    %s86 = sphi 0, %s72
    %s90 = sphi 0, %s90
    %s92 = sphi 0, %s90
    %s93 = sphi 0, %s92
    %s107 = sphi 0, %s93
    %s111 = sphi 0, %s111
    %s113 = sphi 0, %s111
    %s114 = sphi 0, %s113
    %s128 = sphi 0, %s114
    %s134 = sphi 0, %s136
    %s137 = sphi 0, %s134
    %s138 = sphi 0, %s137
    %s154 = sphi 0, %s138
    %s160 = sphi 0, %s162
    %s163 = sphi 0, %s160
    %s164 = sphi 0, %s163
    %s180 = sphi 0, %s164
    %s186 = sphi 0, %s188
    %s189 = sphi 0, %s186
    %s190 = sphi 0, %s189
    %s206 = sphi 0, %s190
  $region4: #{clone_model_forward.1} parent=0 // loop_header_branch
    %17 = sbr.rel (%p15) target = $region8
  $region5: #{clone_model_forward.1} parent=0 // loop_body
    %s19 = ssub.s32 %s14, 1
    %s20 = ssub.s32 %s14, 2
    %s21 = sadd.s32 %s14, 1
    %s22 = ssub.s32 %s14, %s21
    %p23 = scmp.eq.s32.totalorder %s22, 0
    %s25 = sadd.s32 %s24, 1
    %s26 = scalar_select %p23, %s24, %s25
    %p29 = pneg %p23
    %p30 = scmp.eq.s32.totalorder %s14, 1
    %p31 = por %p29, %p30
    %p32 = scmp.ne.s32.totalorder %s24, %s27
    %p33 = scmp.eq.s32.totalorder %s14, 0
    %p34 = por %p32, %p33
    %p35 = scmp.ne.s32.totalorder %s24, %s27
    %p36 = scmp.eq.s32.totalorder %s19, 1
    %p37 = por %p35, %p36
    %p38 = scmp.ne.s32.totalorder %s27, %s28
    %p39 = scmp.eq.s32.totalorder %s19, 0
    %p40 = por %p38, %p39
    %p41 = scmp.ne.s32.totalorder %s27, %s28
    %p42 = scmp.eq.s32.totalorder %s20, 1
    %p43 = por %p41, %p42
    %p45 = scmp.ne.s32.totalorder %s28, %s44
    %p46 = scmp.eq.s32.totalorder %s20, 0
    %p47 = por %p45, %p46
    %s49 = sadd.s32 %s48, 1
    %p52 = scmp.eq.s32.totalorder %s14, 1
    %p53 = scmp.ne.s32.totalorder %s48, %s50
    %p54 = scmp.eq.s32.totalorder %s14, 0
    %p55 = por %p53, %p54
    %p56 = scmp.ne.s32.totalorder %s48, %s50
    %p57 = scmp.eq.s32.totalorder %s19, 1
    %p58 = por %p56, %p57
    %p59 = scmp.ne.s32.totalorder %s50, %s51
    %p60 = scmp.eq.s32.totalorder %s19, 0
    %p61 = por %p59, %p60
    %p62 = scmp.ne.s32.totalorder %s50, %s51
    %p63 = scmp.eq.s32.totalorder %s20, 1
    %p64 = por %p62, %p63
    %p66 = scmp.ne.s32.totalorder %s51, %s65
    %p67 = scmp.eq.s32.totalorder %s20, 0
    %p68 = por %p66, %p67
    %s70 = sadd.s32 %s69, 1
    %p73 = scmp.eq.s32.totalorder %s14, 1
    %p74 = scmp.ne.s32.totalorder %s69, %s71
    %p75 = scmp.eq.s32.totalorder %s14, 0
    %p76 = por %p74, %p75
    %p77 = scmp.ne.s32.totalorder %s69, %s71
    %p78 = scmp.eq.s32.totalorder %s19, 1
    %p79 = por %p77, %p78
    %p80 = scmp.ne.s32.totalorder %s71, %s72
    %p81 = scmp.eq.s32.totalorder %s19, 0
    %p82 = por %p80, %p81
    %p83 = scmp.ne.s32.totalorder %s71, %s72
    %p84 = scmp.eq.s32.totalorder %s20, 1
    %p85 = por %p83, %p84
    %p87 = scmp.ne.s32.totalorder %s72, %s86
    %p88 = scmp.eq.s32.totalorder %s20, 0
    %p89 = por %p87, %p88
    %s91 = sadd.s32 %s90, 1
    %p94 = scmp.eq.s32.totalorder %s14, 1
    %p95 = scmp.ne.s32.totalorder %s90, %s92
    %p96 = scmp.eq.s32.totalorder %s14, 0
    %p97 = por %p95, %p96
    %p98 = scmp.ne.s32.totalorder %s90, %s92
    %p99 = scmp.eq.s32.totalorder %s19, 1
    %p100 = por %p98, %p99
    %p101 = scmp.ne.s32.totalorder %s92, %s93
    %p102 = scmp.eq.s32.totalorder %s19, 0
    %p103 = por %p101, %p102
    %p104 = scmp.ne.s32.totalorder %s92, %s93
    %p105 = scmp.eq.s32.totalorder %s20, 1
    %p106 = por %p104, %p105
    %p108 = scmp.ne.s32.totalorder %s93, %s107
    %p109 = scmp.eq.s32.totalorder %s20, 0
    %p110 = por %p108, %p109
    %s112 = sadd.s32 %s111, 1
    %p115 = scmp.eq.s32.totalorder %s14, 1
    %p116 = scmp.ne.s32.totalorder %s111, %s113
    %p117 = scmp.eq.s32.totalorder %s14, 0
    %p118 = por %p116, %p117
    %p119 = scmp.ne.s32.totalorder %s111, %s113
    %p120 = scmp.eq.s32.totalorder %s19, 1
    %p121 = por %p119, %p120
    %p122 = scmp.ne.s32.totalorder %s113, %s114
    %p123 = scmp.eq.s32.totalorder %s19, 0
    %p124 = por %p122, %p123
    %p125 = scmp.ne.s32.totalorder %s113, %s114
    %p126 = scmp.eq.s32.totalorder %s20, 1
    %p127 = por %p125, %p126
    %p129 = scmp.ne.s32.totalorder %s114, %s128
    %p130 = scmp.eq.s32.totalorder %s20, 0
    %p131 = por %p129, %p130
    %s132 = ssub.s32 %s14, %s21
    %p133 = scmp.eq.s32.totalorder %s132, 0
    %s135 = sadd.s32 %s134, 1
    %s136 = scalar_select %p133, %s134, %s135
    %p139 = pneg %p133
    %p140 = scmp.eq.s32.totalorder %s14, 1
    %p141 = por %p139, %p140
    %p142 = scmp.ne.s32.totalorder %s134, %s137
    %p143 = scmp.eq.s32.totalorder %s14, 0
    %p144 = por %p142, %p143
    %p145 = scmp.ne.s32.totalorder %s134, %s137
    %p146 = scmp.eq.s32.totalorder %s19, 1
    %p147 = por %p145, %p146
    %p148 = scmp.ne.s32.totalorder %s137, %s138
    %p149 = scmp.eq.s32.totalorder %s19, 0
    %p150 = por %p148, %p149
    %p151 = scmp.ne.s32.totalorder %s137, %s138
    %p152 = scmp.eq.s32.totalorder %s20, 1
    %p153 = por %p151, %p152
    %p155 = scmp.ne.s32.totalorder %s138, %s154
    %p156 = scmp.eq.s32.totalorder %s20, 0
    %p157 = por %p155, %p156
    %s158 = ssub.s32 %s14, %s21
    %p159 = scmp.eq.s32.totalorder %s158, 0
    %s161 = sadd.s32 %s160, 1
    %s162 = scalar_select %p159, %s160, %s161
    %p165 = pneg %p159
    %p166 = scmp.eq.s32.totalorder %s14, 1
    %p167 = por %p165, %p166
    %p168 = scmp.ne.s32.totalorder %s160, %s163
    %p169 = scmp.eq.s32.totalorder %s14, 0
    %p170 = por %p168, %p169
    %p171 = scmp.ne.s32.totalorder %s160, %s163
    %p172 = scmp.eq.s32.totalorder %s19, 1
    %p173 = por %p171, %p172
    %p174 = scmp.ne.s32.totalorder %s163, %s164
    %p175 = scmp.eq.s32.totalorder %s19, 0
    %p176 = por %p174, %p175
    %p177 = scmp.ne.s32.totalorder %s163, %s164
    %p178 = scmp.eq.s32.totalorder %s20, 1
    %p179 = por %p177, %p178
    %p181 = scmp.ne.s32.totalorder %s164, %s180
    %p182 = scmp.eq.s32.totalorder %s20, 0
    %p183 = por %p181, %p182
    %s184 = ssub.s32 %s14, %s21
    %p185 = scmp.eq.s32.totalorder %s184, 0
    %s187 = sadd.s32 %s186, 1
    %s188 = scalar_select %p185, %s186, %s187
    %p191 = pneg %p185
    %p192 = scmp.eq.s32.totalorder %s14, 1
    %p193 = por %p191, %p192
    %p194 = scmp.ne.s32.totalorder %s186, %s189
    %p195 = scmp.eq.s32.totalorder %s14, 0
    %p196 = por %p194, %p195
    %p197 = scmp.ne.s32.totalorder %s186, %s189
    %p198 = scmp.eq.s32.totalorder %s19, 1
    %p199 = por %p197, %p198
    %p200 = scmp.ne.s32.totalorder %s189, %s190
    %p201 = scmp.eq.s32.totalorder %s19, 0
    %p202 = por %p200, %p201
    %p203 = scmp.ne.s32.totalorder %s189, %s190
    %p204 = scmp.eq.s32.totalorder %s20, 1
    %p205 = por %p203, %p204
    %p207 = scmp.ne.s32.totalorder %s190, %s206
    %p208 = scmp.eq.s32.totalorder %s20, 0
    %p209 = por %p207, %p208
    %p210 = scmp.le.s32.totalorder 1, %s14
    %p211 = scmp.lt.s32.totalorder %s14, 3
    %p212 = pnand %p210, %p211
    %p213 = pneg %p212
    // Predicated region
    $region9: #{clone_model_forward.1} parent=5 // pred_check
      _
    $region10: #{clone_model_forward.1} parent=5 // pred_check_branch
      %215 = sbr.rel (%p212) target = $region12
    $region11: #{clone_model_forward.1} parent=5 // pred_region
      %s216 = ssub.s32 %s14, 1
      // Predicated region
      $region13: #{clone_model_forward.1} parent=11 // pred_check
        %p217 = pneg %p61
      $region14: #{clone_model_forward.1} parent=11 // pred_check_branch
        %219 = sbr.rel (%p217) target = $region16
      $region15: #{clone_model_forward.1} parent=11 // pred_region
        _
      $region16: #{clone_model_forward.1} parent=11 // pred_fallthru
        _
      // Predicated region
      $region17: #{clone_model_forward.1} parent=11 // pred_check
        %p220 = pneg %p82
      $region18: #{clone_model_forward.1} parent=11 // pred_check_branch
        %222 = sbr.rel (%p220) target = $region20
      $region19: #{clone_model_forward.1} parent=11 // pred_region
        _
      $region20: #{clone_model_forward.1} parent=11 // pred_fallthru
        _
      // Predicated region
      $region21: #{clone_model_forward.1} parent=11 // pred_check
        %p223 = pneg %p103
      $region22: #{clone_model_forward.1} parent=11 // pred_check_branch
        %225 = sbr.rel (%p223) target = $region24
      $region23: #{clone_model_forward.1} parent=11 // pred_region
        _
      $region24: #{clone_model_forward.1} parent=11 // pred_fallthru
        _
      // Predicated region
      $region25: #{clone_model_forward.1} parent=11 // pred_check
        %p226 = pneg %p124
      $region26: #{clone_model_forward.1} parent=11 // pred_check_branch
        %228 = sbr.rel (%p226) target = $region28
      $region27: #{clone_model_forward.1} parent=11 // pred_region
        _
      $region28: #{clone_model_forward.1} parent=11 // pred_fallthru
        _
    $region12: #{clone_model_forward.1} parent=5 // pred_fallthru
      _
    %p229 = scmp.lt.s32.totalorder %s14, 2
    // Predicated region
    $region29: #{clone_model_forward.1} parent=5 // pred_check
      %p230 = pneg %p229
    $region30: #{clone_model_forward.1} parent=5 // pred_check_branch
      %232 = sbr.rel (%p230) target = $region32
    $region31: #{clone_model_forward.1} parent=5 // pred_region
      // Predicated region
      $region33: #{clone_model_forward.1} parent=31 // pred_check
        %p233 = pneg %p34
      $region34: #{clone_model_forward.1} parent=31 // pred_check_branch
        %235 = sbr.rel (%p233) target = $region36
      $region35: #{clone_model_forward.1} parent=31 // pred_region
        %p236 = scmp.lt.s32.totalorder %s14, 1
        %s237 = scalar_select %p236, %s14, 1
        %s238 = smul.addr %s237, 4
        %s239 = scalar_lea.vmem %s0, %s238
      $region36: #{clone_model_forward.1} parent=31 // pred_fallthru
        _
      // Predicated region
      $region37: #{clone_model_forward.1} parent=31 // pred_check
        %p240 = pneg %p144
      $region38: #{clone_model_forward.1} parent=31 // pred_check_branch
        %242 = sbr.rel (%p240) target = $region40
      $region39: #{clone_model_forward.1} parent=31 // pred_region
        %p243 = scmp.lt.s32.totalorder %s14, 1
        %s244 = scalar_select %p243, %s14, 1
        %s245 = smul.addr %s244, 8
        %s246 = scalar_lea.vmem %s5, %s245
      $region40: #{clone_model_forward.1} parent=31 // pred_fallthru
        _
    $region32: #{clone_model_forward.1} parent=5 // pred_fallthru
      _
    %p247 = scmp.le.s32.totalorder 1, %s14
    %p248 = scmp.lt.s32.totalorder %s14, 3
    %p249 = pnand %p247, %p248
    %p250 = pneg %p249
    // Predicated region
    $region41: #{clone_model_forward.1} parent=5 // pred_check
      _
    $region42: #{clone_model_forward.1} parent=5 // pred_check_branch
      %252 = sbr.rel (%p249) target = $region44
    $region43: #{clone_model_forward.1} parent=5 // pred_region
      %s253 = ssub.s32 %s14, 1
      %p254 = scmp.lt.s32.totalorder %s19, 1
      %s255 = scalar_select %p254, %s19, 1
      %s256 = smul.addr %s255, 4
      %s257 = scalar_lea.vmem %s0, %s256
      %p258 = pneg %p40
      %p259 = pneg %p37
      %p260 = pneg %p61
      %p261 = pneg %p58
      %p262 = pneg %p82
      %p263 = pneg %p79
      %p264 = pneg %p103
      %p265 = pneg %p100
      %p266 = pneg %p124
      %p267 = pneg %p121
      %p268 = scmp.lt.s32.totalorder %s19, 1
      %s269 = scalar_select %p268, %s19, 1
      %s270 = smul.addr %s269, 8
      %s271 = scalar_lea.vmem %s5, %s270
      %p272 = pneg %p150
      %p273 = pneg %p147
      %p274 = pneg %p176
      %p275 = pneg %p173
      %p276 = scmp.lt.s32.totalorder %s19, 1
      %s277 = scalar_select %p276, %s19, 1
      %s278 = smul.addr %s277, 8
      %s279 = scalar_lea.vmem %s6, %s278
      %p280 = pneg %p202
      %p281 = pneg %p199
      %p282 = scmp.lt.s32.totalorder %s19, 1
      %s283 = scalar_select %p282, %s19, 1
      %s284 = scalar_lea.vmem %s7, %s283
      %p285 = scmp.lt.s32.totalorder %s19, 1
      %s286 = scalar_select %p285, %s19, 1
      %s287 = smul.addr %s286, 4
      %s288 = scalar_lea.vmem %s0, %s287
      %p289 = scmp.lt.s32.totalorder %s19, 1
      %s290 = scalar_select %p289, %s19, 1
      %s291 = smul.addr %s290, 8
      %s292 = scalar_lea.vmem %s5, %s291
      %p293 = scmp.lt.s32.totalorder %s19, 1
      %s294 = scalar_select %p293, %s19, 1
      %s295 = smul.addr %s294, 8
      %s296 = scalar_lea.vmem %s6, %s295
      %p297 = scmp.lt.s32.totalorder %s19, 1
      %s298 = scalar_select %p297, %s19, 1
      %s299 = scalar_lea.vmem %s7, %s298
      %v301 = vld [vmem:[%s288] sm:$0xf]
      %v302 = vld [vmem:[%s1] sm:$0xf]
      %v303 = vld [vmem:[%s1 + $0x4] sm:$0xf]
      %v304 = vld [vmem:[%s1 + $0x8] sm:$0xf]
      %v305 = vld [vmem:[%s1 + $0xc] sm:$0xf]
      %v306 = vld [vmem:[%s1 + $0x10] sm:$0xf]
      %v307 = vld [vmem:[%s1 + $0x14] sm:$0xf]
      %v308 = vld [vmem:[%s1 + $0x18] sm:$0xf]
      %v309 = vld [vmem:[%s1 + $0x1c] sm:$0xf]
      %v310 = vld [vmem:[%s1 + $0x20] sm:$0xf]
      %v311 = vld [vmem:[%s1 + $0x24] sm:$0xf]
      %v312 = vld [vmem:[%s1 + $0x28] sm:$0xf]
      %v313 = vld [vmem:[%s1 + $0x2c] sm:$0xf]
      %v314 = vld [vmem:[%s1 + $0x30] sm:$0xf]
      %v315 = vld [vmem:[%s1 + $0x34] sm:$0xf]
      %v316 = vld [vmem:[%s1 + $0x38] sm:$0xf]
      %v317 = vld [vmem:[%s1 + $0x3c] sm:$0xf]
      %v318 = vld [vmem:[%s2] sm:$0x1]
      %v320 = vlaneseq
      %v321 = vshrl.u32 %v320, 7
      %v322 = vsub.s32 0, %v321
      %v323 = vrot.slane %v318, %v322
      %v341 = vunpack.c.l.b16 %v302
      %v342 = vunpack.c.l.b16 %v303
      %v343 = vunpack.c.l.b16 %v304
      %v344 = vunpack.c.l.b16 %v305
      %v345 = vunpack.c.l.b16 %v306
      %v346 = vunpack.c.l.b16 %v307
      %v347 = vunpack.c.l.b16 %v308
      %v348 = vunpack.c.l.b16 %v309
      %v349 = vunpack.c.l.b16 %v310
      %v350 = vunpack.c.l.b16 %v311
      %v351 = vunpack.c.l.b16 %v312
      %v352 = vunpack.c.l.b16 %v313
      %v353 = vunpack.c.l.b16 %v314
      %v354 = vunpack.c.l.b16 %v315
      %v355 = vunpack.c.l.b16 %v316
      %v356 = vunpack.c.l.b16 %v317
      %v357 = vpack.c.b16 %v342, %v341
      %v358 = vpack.c.b16 %v344, %v343
      %v359 = vpack.c.b16 %v346, %v345
      %v360 = vpack.c.b16 %v348, %v347
      %v361 = vpack.c.b16 %v350, %v349
      %v362 = vpack.c.b16 %v352, %v351
      %v363 = vpack.c.b16 %v354, %v353
      %v364 = vpack.c.b16 %v356, %v355
      %373 = vmatprep.subr.bf16.mxu0 0
      %374 = vmatpush1.bf16.msra.mxu0 %v357
      %375 = vmatprep.subr.bf16.mxu0 0
      %376 = vmatpush1.bf16.msra.mxu0 %v358
      %377 = vmatprep.subr.bf16.mxu0 0
      %378 = vmatpush1.bf16.msra.mxu0 %v359
      %379 = vmatprep.subr.bf16.mxu0 0
      %380 = vmatpush1.bf16.msra.mxu0 %v360
      %381 = vmatprep.subr.bf16.mxu0 0
      %382 = vmatpush1.bf16.msra.mxu0 %v361
      %383 = vmatprep.subr.bf16.mxu0 0
      %384 = vmatpush1.bf16.msra.mxu0 %v362
      %385 = vmatprep.subr.bf16.mxu0 0
      %386 = vmatpush1.bf16.msra.mxu0 %v363
      %387 = vmatprep.subr.bf16.mxu0 0
      %388 = vmatpush1.bf16.msra.mxu0 %v364
      %389 = vmatprep.subr.bf16.mxu0 0
      %390 = vmatpush1.bf16.msra.mxu0 0
      %391 = vmatprep.subr.bf16.mxu0 0
      %392 = vmatpush1.bf16.msra.mxu0 0
      %393 = vmatprep.subr.bf16.mxu0 0
      %394 = vmatpush1.bf16.msra.mxu0 0
      %395 = vmatprep.subr.bf16.mxu0 0
      %396 = vmatpush1.bf16.msra.mxu0 0
      %397 = vmatprep.subr.bf16.mxu0 0
      %398 = vmatpush1.bf16.msra.mxu0 0
      %399 = vmatprep.subr.bf16.mxu0 0
      %400 = vmatpush1.bf16.msra.mxu0 0
      %401 = vmatprep.subr.bf16.mxu0 0
      %402 = vmatpush1.bf16.msra.mxu0 0
      %403 = vmatprep.subr.bf16.mxu0 0
      %404 = vmatpush1.bf16.msra.mxu0 0
      %405 = vmatprep.mubr.bf16.mxu0 0
      %406 = vmatmul.mubr.bf16.gmra.mrb[0].mxu0 %v301
      %v407 = vpop.f32.mrb[0].mxu0
      %v408 = vadd.f32 %v323, %v407
      %v409 = vpop.f32.mrb[0].mxu0
      %v410 = vpop.f32.mrb[0].mxu0
      %v411 = vpop.f32.mrb[0].mxu0
      %412 = vdwg.mxu0
      %v413 = vtanh.pop %v408
      %v414 = vpack.c.bf16 %v413, %v413
      %v415 = vld [vmem:[%s3] sm:$0xf]
      %v416 = vld [vmem:[%s3 + $0x4] sm:$0xf]
      %v417 = vld [vmem:[%s3 + $0x8] sm:$0xf]
      %v418 = vld [vmem:[%s3 + $0xc] sm:$0xf]
      %v419 = vld [vmem:[%s3 + $0x10] sm:$0xf]
      %v420 = vld [vmem:[%s3 + $0x14] sm:$0xf]
      %v421 = vld [vmem:[%s3 + $0x18] sm:$0xf]
      %v422 = vld [vmem:[%s3 + $0x1c] sm:$0xf]
      %v423 = vld [vmem:[%s3 + $0x20] sm:$0xf]
      %v424 = vld [vmem:[%s3 + $0x24] sm:$0xf]
      %v425 = vld [vmem:[%s3 + $0x28] sm:$0xf]
      %v426 = vld [vmem:[%s3 + $0x2c] sm:$0xf]
      %v427 = vld [vmem:[%s3 + $0x30] sm:$0xf]
      %v428 = vld [vmem:[%s3 + $0x34] sm:$0xf]
      %v429 = vld [vmem:[%s3 + $0x38] sm:$0xf]
      %v430 = vld [vmem:[%s3 + $0x3c] sm:$0xf]
      %v431 = vld [vmem:[%s4] sm:$0x1]
      %v433 = vlaneseq
      %v434 = vshrl.u32 %v433, 7
      %v435 = vsub.s32 0, %v434
      %v436 = vrot.slane %v431, %v435
      %v454 = vunpack.c.l.b16 %v415
      %v455 = vunpack.c.l.b16 %v416
      %v456 = vunpack.c.l.b16 %v417
      %v457 = vunpack.c.l.b16 %v418
      %v458 = vunpack.c.l.b16 %v419
      %v459 = vunpack.c.l.b16 %v420
      %v460 = vunpack.c.l.b16 %v421
      %v461 = vunpack.c.l.b16 %v422
      %v462 = vunpack.c.l.b16 %v423
      %v463 = vunpack.c.l.b16 %v424
      %v464 = vunpack.c.l.b16 %v425
      %v465 = vunpack.c.l.b16 %v426
      %v466 = vunpack.c.l.b16 %v427
      %v467 = vunpack.c.l.b16 %v428
      %v468 = vunpack.c.l.b16 %v429
      %v469 = vunpack.c.l.b16 %v430
      %v470 = vpack.c.b16 %v455, %v454
      %v471 = vpack.c.b16 %v457, %v456
      %v472 = vpack.c.b16 %v459, %v458
      %v473 = vpack.c.b16 %v461, %v460
      %v474 = vpack.c.b16 %v463, %v462
      %v475 = vpack.c.b16 %v465, %v464
      %v476 = vpack.c.b16 %v467, %v466
      %v477 = vpack.c.b16 %v469, %v468
      %486 = vmatprep.subr.bf16.mxu0 0
      %487 = vmatpush1.bf16.msra.mxu0 %v470
      %488 = vmatprep.subr.bf16.mxu0 0
      %489 = vmatpush1.bf16.msra.mxu0 %v471
      %490 = vmatprep.subr.bf16.mxu0 0
      %491 = vmatpush1.bf16.msra.mxu0 %v472
      %492 = vmatprep.subr.bf16.mxu0 0
      %493 = vmatpush1.bf16.msra.mxu0 %v473
      %494 = vmatprep.subr.bf16.mxu0 0
      %495 = vmatpush1.bf16.msra.mxu0 %v474
      %496 = vmatprep.subr.bf16.mxu0 0
      %497 = vmatpush1.bf16.msra.mxu0 %v475
      %498 = vmatprep.subr.bf16.mxu0 0
      %499 = vmatpush1.bf16.msra.mxu0 %v476
      %500 = vmatprep.subr.bf16.mxu0 0
      %501 = vmatpush1.bf16.msra.mxu0 %v477
      %502 = vmatprep.subr.bf16.mxu0 0
      %503 = vmatpush1.bf16.msra.mxu0 0
      %504 = vmatprep.subr.bf16.mxu0 0
      %505 = vmatpush1.bf16.msra.mxu0 0
      %506 = vmatprep.subr.bf16.mxu0 0
      %507 = vmatpush1.bf16.msra.mxu0 0
      %508 = vmatprep.subr.bf16.mxu0 0
      %509 = vmatpush1.bf16.msra.mxu0 0
      %510 = vmatprep.subr.bf16.mxu0 0
      %511 = vmatpush1.bf16.msra.mxu0 0
      %512 = vmatprep.subr.bf16.mxu0 0
      %513 = vmatpush1.bf16.msra.mxu0 0
      %514 = vmatprep.subr.bf16.mxu0 0
      %515 = vmatpush1.bf16.msra.mxu0 0
      %516 = vmatprep.subr.bf16.mxu0 0
      %517 = vmatpush1.bf16.msra.mxu0 0
      %518 = vmatprep.mubr.bf16.mxu0 0
      %519 = vmatmul.mubr.bf16.gmra.mrb[0].mxu0 %v414
      %v520 = vpop.f32.mrb[0].mxu0
      %v521 = vadd.f32 %v436, %v520
      %v522 = vpop.f32.mrb[0].mxu0
      %v523 = vpop.f32.mrb[0].mxu0
      %v524 = vpop.f32.mrb[0].mxu0
      %525 = vdwg.mxu0
      %v526 = vlaneseq
      %v527 = vand.u32 %v526, 127
      %vm528 = vcmp.lt.s32.totalorder %v527, 2
      %v529 = vsel %vm528, %v521, -1e+30
      %530 = vmax.xlane.f32.xlu0 %v529
      %v531 = vpop.xlane.xlu0 %530
      %v532 = vsub.f32 %v529, %v531
      %v533 = vmul.f32 %v532, 1.442695
      %v534 = vpow.pop %v533
      %535 = vadd.xlane.f32.xlu0 %v534
      %v536 = vpop.xlane.xlu0 %535
      %v537 = vrcp.pop %v536
      %v538 = vmul.f32 %v534, %v537
      %539 = vst [vmem:[%s296] sm:$0xff] %v538
      %v540 = vlog2.pop %v536
      %v541 = vmul.f32 %v540, 0.6931472
      %v542 = vsub.f32 %v532, %v541
      %v543 = vld [vmem:[%s292] sm:$0xff]
      %v544 = vmul.f32 %v543, %v542
      %545 = vadd.xlane.f32.xlu0 %v544
      %v546 = vpop.xlane.xlu0 %545
      %v547 = vrot.slane %v546, 4
      %v548 = vadd.f32 %v546, %v547
      %v549 = vrot.slane %v548, 2
      %v550 = vadd.f32 %v548, %v549
      %v551 = vrot.slane %v550, 1
      %v552 = vadd.f32 %v550, %v551
      %s553 = vtos %v552
      %s554 = ssub.f32 0.0, %s553
      %v555 = vstv %s554
      %556 = vst [vmem:[%s299] sm:$0x1] %v555
      %p557 = scmp.lt.s32.totalorder %s19, 1
      %s558 = scalar_select %p557, %s19, 1
      %s559 = smul.addr %s558, 8
      %s560 = scalar_lea.vmem %s6, %s559
      %p561 = scmp.lt.s32.totalorder %s19, 1
      %s562 = scalar_select %p561, %s19, 1
      %s563 = scalar_lea.vmem %s7, %s562
      // Predicated region
      $region45: #{clone_model_forward.1} parent=43 // pred_check
        %p564 = pneg %p173
      $region46: #{clone_model_forward.1} parent=43 // pred_check_branch
        %566 = sbr.rel (%p564) target = $region48
      $region47: #{clone_model_forward.1} parent=43 // pred_region
        _
      $region48: #{clone_model_forward.1} parent=43 // pred_fallthru
        _
      // Predicated region
      $region49: #{clone_model_forward.1} parent=43 // pred_check
        %p567 = pneg %p199
      $region50: #{clone_model_forward.1} parent=43 // pred_check_branch
        %569 = sbr.rel (%p567) target = $region52
      $region51: #{clone_model_forward.1} parent=43 // pred_region
        _
      $region52: #{clone_model_forward.1} parent=43 // pred_fallthru
        _
    $region44: #{clone_model_forward.1} parent=5 // pred_fallthru
      _
    %p570 = scmp.le.s32.totalorder 2, %s14
    // Predicated region
    $region53: #{clone_model_forward.1} parent=5 // pred_check
      %p571 = pneg %p570
    $region54: #{clone_model_forward.1} parent=5 // pred_check_branch
      %573 = sbr.rel (%p571) target = $region56
    $region55: #{clone_model_forward.1} parent=5 // pred_region
      %s574 = ssub.s32 %s14, 2
      // Predicated region
      $region57: #{clone_model_forward.1} parent=55 // pred_check
        %p575 = pneg %p179
      $region58: #{clone_model_forward.1} parent=55 // pred_check_branch
        %577 = sbr.rel (%p575) target = $region60
      $region59: #{clone_model_forward.1} parent=55 // pred_region
        %p578 = scmp.lt.s32.totalorder %s20, 1
        %s579 = scalar_select %p578, %s20, 1
        %s580 = smul.addr %s579, 8
        %s581 = scalar_lea.vmem %s6, %s580
      $region60: #{clone_model_forward.1} parent=55 // pred_fallthru
        _
      // Predicated region
      $region61: #{clone_model_forward.1} parent=55 // pred_check
        %p582 = pneg %p205
      $region62: #{clone_model_forward.1} parent=55 // pred_check_branch
        %584 = sbr.rel (%p582) target = $region64
      $region63: #{clone_model_forward.1} parent=55 // pred_region
        %p585 = scmp.lt.s32.totalorder %s20, 1
        %s586 = scalar_select %p585, %s20, 1
        %s587 = scalar_lea.vmem %s7, %s586
      $region64: #{clone_model_forward.1} parent=55 // pred_fallthru
        _
    $region56: #{clone_model_forward.1} parent=5 // pred_fallthru
      _
  $region6: #{clone_model_forward.1} parent=0 // loop_footer
    %s18 = sadd.s32 1, %s14
  $region7: #{clone_model_forward.1} parent=0 // loop_footer_branch
    %13 = sbr.rel target = $region3
  $region8: #{clone_model_forward.1} parent=0 // loop_exit
    _

</llo_original>
